<compile_context>
chip_gen: v7x
topology: tpu7x:2x2x1
jax: 0.10.0
libtpu: 0.0.40
codegen_flags: <defaults>
</compile_context>

<pallas_src>
import functools

import jax
import jax.numpy as jnp
import numpy as np
from jax.experimental import pallas as pl
from jax.experimental.pallas import tpu as pltpu


_LINE_TARGET_BYTES = 1024          # minimum contiguous HBM bytes per DMA line
_MAX_BLOCK_BYTES = 4 << 20         # per-step input block target
_MIN_BLOCK_BYTES = 1 << 20         # don't shrink blocks below this for parallelism
_SINGLE_PASS_ROW_BYTES = 256 << 10  # rows up to this size are reduced in one step
_TILED_HT = 2048                   # lane tile for the huge-HW fallback path


def _round_up(a: int, b: int) -> int:
    return ((a + b - 1) // b) * b


def _cdiv(a: int, b: int) -> int:
    return -(-a // b)


def _pick_k(r: int, hw: int, itemsize: int) -> int:
    """Packing factor: k rows per DMA line (k divides r, keeps r // k >= 8)."""
    if hw * itemsize >= _LINE_TARGET_BYTES:
        return 1
    best = 1
    for k in range(2, min(256, r // 8) + 1):
        if r % k:
            continue
        if k * k * hw * itemsize > (1 << 20):   # keep the selector matrix small
            break
        best = k
        if k * hw * itemsize >= _LINE_TARGET_BYTES:
            break
    return best


def _pick_rows(rg: int, row_bytes: int) -> int:
    """Row-block size: multiple of 8, 1-4 MiB blocks, >=8 row blocks if possible."""
    rows_min = max(1, _cdiv(_MIN_BLOCK_BYTES, row_bytes))
    rows_max = max(rows_min, _MAX_BLOCK_BYTES // row_bytes)
    rows_split = max(1, _cdiv(rg, 8))           # aim for >=8 blocks (v7x 2 TCs)
    rt = _round_up(min(max(rows_split, rows_min), rows_max), 8)
    return rg if rt >= rg else rt


# --------------------------------------------------------------------------- #
# Kernels
# --------------------------------------------------------------------------- #
def _rowmean_kernel(x_ref, o_ref, *, inv_hw):
    # x_ref: (RT, HW) with the full trailing extent -> no padded lanes, no mask.
    x = x_ref[...].astype(jnp.float32)
    o_ref[...] = (jnp.sum(x, axis=1, keepdims=True) * inv_hw).astype(o_ref.dtype)


def _packed_kernel(x_ref, m_ref, o_ref):
    # x_ref: (RT, k*HW)  -- k original rows packed per lane-dense super-row.
    # m_ref: (k*HW, k)   -- selector matrix already scaled by 1/HW.
    # Group-wise mean == one MXU matmul; the MXU is otherwise idle here.
    x = x_ref[...].astype(jnp.float32)
    o_ref[...] = jnp.dot(
        x, m_ref[...],
        preferred_element_type=jnp.float32,
        precision=jax.lax.Precision.HIGHEST,
    ).astype(o_ref.dtype)


def _tiled_kernel(x_ref, o_ref, acc_ref, *, hw, ht, inv_hw):
    h = pl.program_id(1)
    nh = pl.num_programs(1)

    @pl.when(h == 0)
    def _():
        acc_ref[...] = jnp.zeros_like(acc_ref)

    x = x_ref[...].astype(jnp.float32)          # (RT, HT)

    def accumulate(xv):
        # Fold HT lanes down to 128 with aligned VPU adds (co-issue with loads);
        # the single cross-lane (XLU) reduce is deferred to the finalize step.
        psum = xv[:, 0:128]
        for kk in range(1, ht // 128):
            psum = psum + xv[:, kk * 128:(kk + 1) * 128]
        acc_ref[...] += psum

    if hw % ht != 0:
        # Only the final HW tile can hold out-of-range lanes: keep the
        # iota/compare/select off the steady-state path (perf-review item).
        @pl.when(h < nh - 1)
        def _():
            accumulate(x)

        @pl.when(h == nh - 1)
        def _():
            lane = jax.lax.broadcasted_iota(jnp.int32, x.shape, 1)
            accumulate(jnp.where(h * ht + lane < hw, x, 0.0))
    else:
        accumulate(x)

    @pl.when(h == nh - 1)
    def _():
        row_sum = jnp.sum(acc_ref[...], axis=1, keepdims=True)   # (RT, 1)
        o_ref[...] = (row_sum * inv_hw).astype(o_ref.dtype)


# --------------------------------------------------------------------------- #
# Wrapper
# --------------------------------------------------------------------------- #
def gap(x):
    """x: (N, C, H, W) -> (N, C), mean over H and W (== x.mean(3).mean(2))."""
    assert x.ndim == 4, "GAP expects NCHW input"
    N, C, H, W = x.shape
    R, HW = N * C, H * W
    itemsize = jnp.dtype(x.dtype).itemsize
    inv_hw = 1.0 / HW
    x2 = x.reshape(R, HW)                       # free: row-major contiguous

    cost = pl.CostEstimate(
        flops=R * HW,
        transcendentals=0,
        bytes_accessed=R * HW * itemsize + R * itemsize,
    )

    # ---- huge spatial size: tiled reduction over the HW axis ---------------
    if HW * itemsize > _SINGLE_PASS_ROW_BYTES:
        RT = min(512, _round_up(max(1, _cdiv(R, 2)), 8))
        if RT >= R:
            RT = R
        HT = _TILED_HT
        out = pl.pallas_call(
            functools.partial(_tiled_kernel, hw=HW, ht=HT, inv_hw=inv_hw),
            out_shape=jax.ShapeDtypeStruct((R, 1), x.dtype),
            grid_spec=pltpu.PrefetchScalarGridSpec(
                num_scalar_prefetch=0,
                grid=(pl.cdiv(R, RT), pl.cdiv(HW, HT)),     # reduction axis last
                in_specs=[pl.BlockSpec((RT, HT), lambda r, h: (r, h))],
                out_specs=pl.BlockSpec((RT, 1), lambda r, h: (r, 0)),
                scratch_shapes=[pltpu.VMEM((RT, 128), jnp.float32)],
            ),
            compiler_params=pltpu.CompilerParams(
                dimension_semantics=("parallel", "arbitrary")),
            cost_estimate=cost,
        )(x2)
        return out.reshape(N, C)

    k = _pick_k(R, HW, itemsize)
    Rg = R // k
    RT = _pick_rows(Rg, k * HW * itemsize)
    grid = (pl.cdiv(Rg, RT),)

    # ---- moderate spatial size: full-row single-pass mean ------------------
    if k == 1:
        out = pl.pallas_call(
            functools.partial(_rowmean_kernel, inv_hw=inv_hw),
            out_shape=jax.ShapeDtypeStruct((R, 1), x.dtype),
            grid_spec=pltpu.PrefetchScalarGridSpec(
                num_scalar_prefetch=0,
                grid=grid,
                in_specs=[pl.BlockSpec((RT, HW), lambda r: (r, 0))],
                out_specs=pl.BlockSpec((RT, 1), lambda r: (r, 0)),
            ),
            compiler_params=pltpu.CompilerParams(
                dimension_semantics=("parallel",)),
            cost_estimate=cost,
        )(x2)
        return out.reshape(N, C)

    # ---- small spatial size: pack k rows per lane-dense super-row ----------
    xg = x2.reshape(Rg, k * HW)                 # free: row-major contiguous
    # Selector: M[i, j] = 1/HW if i // HW == j else 0  -> group-wise mean.
    sel = np.repeat(np.eye(k, dtype=np.float32), HW, axis=0) * np.float32(inv_hw)
    m = jnp.asarray(sel)

    out = pl.pallas_call(
        _packed_kernel,
        out_shape=jax.ShapeDtypeStruct((Rg, k), x.dtype),
        grid_spec=pltpu.PrefetchScalarGridSpec(
            num_scalar_prefetch=0,
            grid=grid,
            in_specs=[pl.BlockSpec((RT, k * HW), lambda r: (r, 0)),
                      pl.BlockSpec((k * HW, k), lambda r: (0, 0))],
            out_specs=pl.BlockSpec((RT, k), lambda r: (r, 0)),
        ),
        compiler_params=pltpu.CompilerParams(
            dimension_semantics=("parallel",)),
        cost_estimate=cost,
    )(xg, m)
    return out.reshape(N, C)


if __name__ == "__main__":
    root = jax.random.PRNGKey(0)

    # (shape, tolerance).  The packed path reduces via an MXU f32 matmul, so
    # its tolerance is loose enough for any f32-emulation mode of the MXU;
    # a genuinely wrong kernel would be off by O(0.1).
    cases = [
        ((2, 4, 16, 16), 1e-5),     # moderate HW  -> single-pass row-mean path
        ((2, 8, 7, 7), 1e-3),       # tiny HW      -> packed (k rows/line) path
        ((2, 256, 7, 7), 1e-3),     # ResNet-style GAP shape, packed path
        ((2, 4, 7, 9), 1e-5),       # odd spatial, small R -> row-mean path
        ((2, 3, 270, 270), 1e-5),   # huge HW      -> tiled path + gated mask
    ]
    keys = jax.random.split(root, len(cases))
    for (shape, tol), kk in zip(cases, keys):
        x = jax.random.normal(kk, shape, dtype=jnp.float32)
        out = gap(x)
        jax.block_until_ready(out)
        ref = x.mean(axis=3).mean(axis=2)       # == torch x.mean(3).mean(2)
        assert out.shape == ref.shape, shape
        assert jnp.allclose(out, ref, atol=tol, rtol=tol), shape

    print("KERNEL_OK")
</pallas_src>

<mosaic_0001>
module attributes {stable_mosaic.version = 11 : i64} {
  func.func @_rowmean_kernel(%arg0: i32, %arg1: memref<8x256xf32, #tpu.memory_space<vmem>>, %arg2: memref<8x1xf32, #tpu.memory_space<vmem>>) attributes {dimension_semantics = [#tpu.dimension_semantics<parallel>], iteration_bounds = array<i64: 1>, scalar_prefetch = 0 : i64, scratch_operands = 0 : i64, tpu.core_type = #tpu.core_type<tc>, window_params = [{transform_indices = @transform_0, window_bounds = array<i64: 8, 256>}, {transform_indices = @transform_1, window_bounds = array<i64: 8, 1>}]} {
    %c0 = arith.constant 0 : index
    %c0_0 = arith.constant 0 : index
    %0 = vector.load %arg1[%c0, %c0_0] : memref<8x256xf32, #tpu.memory_space<vmem>>, vector<8x256xf32>
    %cst = arith.constant dense<0.000000e+00> : vector<8xf32>
    %1 = vector.multi_reduction <add>, %0, %cst [1] : vector<8x256xf32> to vector<8xf32>
    %2 = vector.shape_cast %1 : vector<8xf32> to vector<8x1xf32>
    %cst_1 = arith.constant 3.906250e-03 : f32
    %3 = vector.broadcast %cst_1 : f32 to vector<8x1xf32>
    %4 = arith.mulf %2, %3 : vector<8x1xf32>
    %c0_2 = arith.constant 0 : index
    %c0_3 = arith.constant 0 : index
    %5 = vector.load %arg2[%c0_2, %c0_3] : memref<8x1xf32, #tpu.memory_space<vmem>>, vector<8x1xf32>
    tpu.vector_store %arg2[%c0_2, %c0_3], %4 {strides = array<i32>} : memref<8x1xf32, #tpu.memory_space<vmem>>, vector<8x1xf32>,
    return
  }
  func.func @transform_0(%arg0: i32) -> (i32, i32) {
    %c0_i32 = arith.constant 0 : i32
    %c0_i32_0 = arith.constant 0 : i32
    return %arg0, %c0_i32 : i32, i32
  }
  func.func @transform_1(%arg0: i32) -> (i32, i32) {
    %c0_i32 = arith.constant 0 : i32
    %c0_i32_0 = arith.constant 0 : i32
    return %arg0, %c0_i32 : i32, i32
  }
}

</mosaic_0001>

<llo_original>
// kernel: tpu_custom_call.1
$region0: #{tpu_custom_call.1}
  #allocation0 [shape = 'u32[]', space=smem, size = 0x4, offset = 0x4, fixed_abs, tag = 'smem constant byte address 0x4 - core index']
  #allocation1 [shape = 'u32[144,128]{1,0:T(1,128)}', space=vmem, size = 0x12000, scoped, tag = 'internal scratch']
  %s0 = inlined_call_operand.hbm [shape: f32[8,256], index: 0, kind: input, shape index: {}]
  %s1 = inlined_call_operand.vmem [shape: f32[8,1], index: 1, kind: output, shape index: {}]
  %s2 = sld [smem:[#allocation0]]
  $region18: #{tpu_custom_call.1} parent=0
    _
  %s4 = ssub.s32 1, %s2
  %s5 = scalar_select 0, %s4, %s2
  $region1: #{tpu_custom_call.1} parent=0
    #allocation2 [shape = 'u8[8192]{0}', space=vmem, size = 0x2000, scoped, tag = 'input window, operand 0, single buffered']
    #allocation3 [shape = 's32[1]{0}', space=sflag, size = 0x4, scoped, tag = 'scoped memory for tpu_custom_call.1']
    %6 = vsyncpa [#allocation3], 0
    // Predicated region
    $region2: #{tpu_custom_call.1} parent=1 // pred_check
      _
    $region3: #{tpu_custom_call.1} parent=1 // pred_check_branch
      %8 = sbr.rel (0) target = $region5
    $region4: #{tpu_custom_call.1} parent=1 // pred_region
      %s10 = ssub.s32 256, 256
      %11 = vsyncadd [#allocation3], %s10
      %s13 = sshll.u32 [#allocation2], 4
      %s14 = int_to_ptr.vmem [resolvable:$true] %s13
      %16 = dma.hbm_to_vmem [thread:$0]  %s0, 256, %s14, [#allocation3]
    $region5: #{tpu_custom_call.1} parent=1 // pred_fallthru
      _
    // Predicated region
    $region6: #{tpu_custom_call.1} parent=1 // pred_check
      _
    $region7: #{tpu_custom_call.1} parent=1 // pred_check_branch
      %18 = sbr.rel (0) target = $region9
    $region8: #{tpu_custom_call.1} parent=1 // pred_region
      %19 = dma.done [#allocation3], 256
    $region9: #{tpu_custom_call.1} parent=1 // pred_fallthru
      _
    %v20 = vld [vmem:[#allocation2] sm:$0xff]
    %v21 = vld [vmem:[#allocation2 + $0x8] sm:$0xff]
    %v22 = vadd.f32 %v20, %v21
    %23 = vadd.xlane.f32.xlu0 %v22
    %v24 = vpop.xlane.xlu0 %23
    %v25 = vmul.f32 %v24, 0.00390625
    %vm26 = vcmask 7168
    %27 = vst.msk [vmem:[%s1] sm:$0xff] %vm26, %v25
    // Predicated region
    $region10: #{tpu_custom_call.1} parent=1 // pred_check
      _
    $region11: #{tpu_custom_call.1} parent=1 // pred_check_branch
      %29 = sbr.rel (0) target = $region13
    $region12: #{tpu_custom_call.1} parent=1 // pred_region
      _
    $region13: #{tpu_custom_call.1} parent=1 // pred_fallthru
      _
    // Predicated region
    $region14: #{tpu_custom_call.1} parent=1 // pred_check
      _
    $region15: #{tpu_custom_call.1} parent=1 // pred_check_branch
      %31 = sbr.rel (0) target = $region17
    $region16: #{tpu_custom_call.1} parent=1 // pred_region
      _
    $region17: #{tpu_custom_call.1} parent=1 // pred_fallthru
      _
    %32 = vsyncpa [#allocation3], 1

</llo_original>
